<compile_context>
chip_gen: v6e
topology: v6e:2x2x1
jax: 0.10.0
libtpu: 0.0.40
codegen_flags: <defaults>
</compile_context>

<pallas_src>
import jax
import jax.numpy as jnp
from jax.experimental import pallas as pl
from jax.experimental.pallas import tpu as pltpu

# ---------------- model / problem sizes (small, deterministic) -------------
B = 2      # batch
S = 8      # sequence length
H = 32     # hidden size
V = 256    # vocab size
IGNORE_INDEX = -100


# -------- Pallas kernel: fused LM head + masked cross-entropy (flash-CE) ---
def fused_lmhead_ce_kernel(h_ref, w_ref, b_ref, lbl_ref, out_ref,
                           m_sc, l_sc, p_sc):
    # h_ref : [TM, H]  bf16      w_ref : [H, TV] bf16     b_ref : [1, TV] f32
    # lbl_ref: [TM, 1] i32 (-100 = ignore)
    # out_ref: [1, 1]  f32 in SMEM (per-row-tile partial loss sum)
    # scratch: m_sc/l_sc/p_sc [TM, 1] f32 (running max / sum-exp / picked logit)
    j = pl.program_id(1)
    nj = pl.num_programs(1)
    tv = w_ref.shape[1]

    @pl.when(j == 0)
    def _init():
        m_sc[...] = jnp.full_like(m_sc, -jnp.inf)
        l_sc[...] = jnp.zeros_like(l_sc)
        p_sc[...] = jnp.zeros_like(p_sc)

    # logits tile on the MXU (bf16 inputs, f32 accumulation)
    logits = jnp.dot(h_ref[...], w_ref[...],
                     preferred_element_type=jnp.float32) + b_ref[...]     # [TM, TV]

    # --- online softmax (log-sum-exp) over vocab tiles ---
    m_prev = m_sc[...]
    m_new = jnp.maximum(m_prev, jnp.max(logits, axis=-1, keepdims=True))
    alpha = jnp.exp(m_prev - m_new)                                       # exp(-inf)=0 at j==0
    l_sc[...] = alpha * l_sc[...] + jnp.sum(jnp.exp(logits - m_new),
                                            axis=-1, keepdims=True)
    m_sc[...] = m_new

    # --- gather the label logit for this vocab tile via one-hot ---
    labels = lbl_ref[...]                                                 # [TM, 1] i32
    col = j * tv + jax.lax.broadcasted_iota(jnp.int32, logits.shape, 1)   # global vocab id
    onehot = (col == labels).astype(jnp.float32)                          # never hits -100
    p_sc[...] += jnp.sum(logits * onehot, axis=-1, keepdims=True)

    @pl.when(j == nj - 1)
    def _finalize():
        lse = jnp.log(l_sc[...]) + m_sc[...]                              # [TM, 1]
        valid = (labels != IGNORE_INDEX).astype(jnp.float32)
        per_token = (lse - p_sc[...]) * valid                             # ignore_index -> 0
        out_ref[0, 0] = jnp.sum(per_token)


def fused_lm_head_ce(hidden, w, b, labels, *, tm=None, tv=128):
    """hidden: [N, H] f32, w: [H, V] f32, b: [1, V] f32, labels: [N] i32
       -> scalar f32 = sum over tokens of CE loss with ignore_index=-100."""
    N, Hh = hidden.shape
    _, Vv = w.shape
    if tm is None:
        tm = N if N <= 256 else 256       # whole array at toy size, 256 rows at scale
    assert N % tm == 0 and Vv % tv == 0
    n_row, n_voc = N // tm, Vv // tv

    # bf16 MXU inputs (v6e/v7x native), f32 accumulation + f32 CE math.
    h_bf = hidden.astype(jnp.bfloat16)
    w_bf = w.astype(jnp.bfloat16)
    labels2d = labels.reshape(N, 1).astype(jnp.int32)

    partial = pl.pallas_call(
        fused_lmhead_ce_kernel,
        out_shape=jax.ShapeDtypeStruct((n_row, 1), jnp.float32),
        grid=(n_row, n_voc),
        in_specs=[
            pl.BlockSpec((tm, Hh), lambda i, j: (i, 0)),   # hidden rows
            pl.BlockSpec((Hh, tv), lambda i, j: (0, j)),   # W vocab tile
            pl.BlockSpec((1, tv), lambda i, j: (0, j)),    # bias vocab tile
            pl.BlockSpec((tm, 1), lambda i, j: (i, 0)),    # labels for this row tile
        ],
        out_specs=pl.BlockSpec((1, 1), lambda i, j: (i, 0),
                               memory_space=pltpu.SMEM),
        scratch_shapes=[
            pltpu.VMEM((tm, 1), jnp.float32),   # running max
            pltpu.VMEM((tm, 1), jnp.float32),   # running sum-exp
            pltpu.VMEM((tm, 1), jnp.float32),   # picked label logit
        ],
        compiler_params=pltpu.CompilerParams(
            dimension_semantics=("parallel", "arbitrary")),
    )(h_bf, w_bf, b, labels2d)
    return jnp.sum(partial)


# ---------------- PromptForGeneration.forward (decoder-only path) ----------
def init_params(key):
    k_emb, k_w, k_b = jax.random.split(key, 3)
    return {
        "embedding": jax.random.normal(k_emb, (V, H), jnp.float32) * 0.02,
        "w_lm": jax.random.normal(k_w, (H, V), jnp.float32) * 0.02,
        "b_lm": jax.random.normal(k_b, (1, V), jnp.float32) * 0.02,
    }


def prompt_for_generation_forward(params, input_ids, loss_ids):
    """Reproduces PromptForGeneration.forward for a decoder-only PLM."""
    Bb, Ss = input_ids.shape
    # synthetic PLM: embedding lookup (glue) feeding the fused Pallas kernel.
    hidden = jnp.take(params["embedding"], input_ids.reshape(-1), axis=0)   # [B*S, H]

    # shift_logits_and_labels (is_encoder_decoder=False), folded into labels:
    # label[b, s] = input_ids[b, s+1] if loss_ids[b, s+1] > 0 else -100,
    # and the final position (no next token) is -100 -> equivalent to the
    # logits[..., :-1, :] slice without copying the biggest tensor.
    next_ids = jnp.concatenate(
        [input_ids[:, 1:], jnp.full((Bb, 1), IGNORE_INDEX, jnp.int32)], axis=1)
    next_loss = jnp.concatenate(
        [loss_ids[:, 1:], jnp.zeros((Bb, 1), loss_ids.dtype)], axis=1)
    labels = jnp.where(next_loss > 0, next_ids, IGNORE_INDEX)              # [B, S]

    # CrossEntropyLoss(reduction='none') -> view(B,-1).sum(-1).sum()
    # == total sum over all valid tokens; computed in-kernel.
    return fused_lm_head_ce(hidden, params["w_lm"], params["b_lm"],
                            labels.reshape(-1))


# ---------------- pure-JAX reference for sanity check -----------------------
def reference_forward(params, input_ids, loss_ids):
    hidden = jnp.take(params["embedding"], input_ids.reshape(-1), axis=0)
    logits = jnp.dot(hidden.astype(jnp.bfloat16),
                     params["w_lm"].astype(jnp.bfloat16),
                     preferred_element_type=jnp.float32) + params["b_lm"]
    logits = logits.reshape(input_ids.shape[0], input_ids.shape[1], V)
    shift_logits = logits[:, :-1, :]
    shift_labels = jnp.where(loss_ids[:, 1:] > 0, input_ids[:, 1:], IGNORE_INDEX)
    logp = jax.nn.log_softmax(shift_logits, axis=-1)
    lbl = jnp.clip(shift_labels, 0, V - 1)
    nll = -jnp.take_along_axis(logp, lbl[..., None], axis=-1)[..., 0]
    nll = jnp.where(shift_labels == IGNORE_INDEX, 0.0, nll)
    return jnp.sum(nll)


if __name__ == "__main__":
    key = jax.random.PRNGKey(0)
    k_params, k_ids, k_loss = jax.random.split(key, 3)

    params = init_params(k_params)
    input_ids = jax.random.randint(k_ids, (B, S), 0, V, dtype=jnp.int32)
    # loss_ids: mark the last few positions of each sequence as loss positions
    loss_ids = (jnp.arange(S)[None, :] >= (S - 3)).astype(jnp.int32)
    loss_ids = jnp.broadcast_to(loss_ids, (B, S))

    loss = prompt_for_generation_forward(params, input_ids, loss_ids)
    loss = jax.block_until_ready(loss)

    ref = reference_forward(params, input_ids, loss_ids)
    assert jnp.allclose(loss, ref, rtol=1e-3, atol=1e-2), (loss, ref)

    # TODO(synk): generate()/post_processing() (autoregressive decoding +
    # tokenizer string handling) have no Pallas equivalent and are omitted.
    print("KERNEL_OK")
</pallas_src>

<mosaic_0001>
module attributes {stable_mosaic.version = 11 : i64} {
  func.func @fused_lmhead_ce_kernel(%arg0: i32, %arg1: i32, %arg2: memref<16x32xbf16, #tpu.memory_space<vmem>>, %arg3: memref<32x128xbf16, #tpu.memory_space<vmem>>, %arg4: memref<1x128xf32, #tpu.memory_space<vmem>>, %arg5: memref<16x1xi32, #tpu.memory_space<vmem>>, %arg6: memref<1x1xf32, #tpu.memory_space<smem>>, %arg7: memref<16x1xf32, #tpu.memory_space<vmem>>, %arg8: memref<16x1xf32, #tpu.memory_space<vmem>>, %arg9: memref<16x1xf32, #tpu.memory_space<vmem>>) attributes {dimension_semantics = [#tpu.dimension_semantics<parallel>, #tpu.dimension_semantics<arbitrary>], iteration_bounds = array<i64: 1, 2>, scalar_prefetch = 0 : i64, scratch_operands = 3 : i64, tpu.core_type = #tpu.core_type<tc>, window_params = [{transform_indices = @transform_0, window_bounds = array<i64: 16, 32>}, {transform_indices = @transform_1, window_bounds = array<i64: 32, 128>}, {transform_indices = @transform_2, window_bounds = array<i64: 1, 128>}, {transform_indices = @transform_3, window_bounds = array<i64: 16, 1>}, {transform_indices = @transform_4, window_bounds = array<i64: 1, 1>}]} {
    %c0_i32 = arith.constant 0 : i32
    %0 = arith.cmpi eq, %arg1, %c0_i32 : i32
    %1 = arith.extui %0 : i1 to i32
    %c0_i32_0 = arith.constant 0 : i32
    %2 = arith.cmpi ne, %1, %c0_i32_0 : i32
    scf.if %2 {
      %cst_24 = arith.constant 0xFF800000 : f32
      %43 = vector.broadcast %cst_24 : f32 to vector<16x1xf32>
      %c0_25 = arith.constant 0 : index
      %c0_26 = arith.constant 0 : index
      %44 = vector.load %arg7[%c0_25, %c0_26] : memref<16x1xf32, #tpu.memory_space<vmem>>, vector<16x1xf32>
      tpu.vector_store %arg7[%c0_25, %c0_26], %43 {strides = array<i32>} : memref<16x1xf32, #tpu.memory_space<vmem>>, vector<16x1xf32>,
      %cst_27 = arith.constant 0.000000e+00 : f32
      %45 = vector.broadcast %cst_27 : f32 to vector<16x1xf32>
      %c0_28 = arith.constant 0 : index
      %c0_29 = arith.constant 0 : index
      %46 = vector.load %arg8[%c0_28, %c0_29] : memref<16x1xf32, #tpu.memory_space<vmem>>, vector<16x1xf32>
      tpu.vector_store %arg8[%c0_28, %c0_29], %45 {strides = array<i32>} : memref<16x1xf32, #tpu.memory_space<vmem>>, vector<16x1xf32>,
      %cst_30 = arith.constant 0.000000e+00 : f32
      %47 = vector.broadcast %cst_30 : f32 to vector<16x1xf32>
      %c0_31 = arith.constant 0 : index
      %c0_32 = arith.constant 0 : index
      %48 = vector.load %arg9[%c0_31, %c0_32] : memref<16x1xf32, #tpu.memory_space<vmem>>, vector<16x1xf32>
      tpu.vector_store %arg9[%c0_31, %c0_32], %47 {strides = array<i32>} : memref<16x1xf32, #tpu.memory_space<vmem>>, vector<16x1xf32>,
    } else {
    }
    %c0 = arith.constant 0 : index
    %c0_1 = arith.constant 0 : index
    %3 = vector.load %arg2[%c0, %c0_1] : memref<16x32xbf16, #tpu.memory_space<vmem>>, vector<16x32xbf16>
    %c0_2 = arith.constant 0 : index
    %c0_3 = arith.constant 0 : index
    %4 = vector.load %arg3[%c0_2, %c0_3] : memref<32x128xbf16, #tpu.memory_space<vmem>>, vector<32x128xbf16>
    %cst = arith.constant dense<0.000000e+00> : vector<16x128xf32>
    %5 = tpu.matmul %3, %4, %cst {dimension_numbers = #tpu.dot_dimension_numbers<[1], [0], [0], [1], [0, 0, 1, 1], [], []>} : vector<16x32xbf16>, vector<32x128xbf16>, vector<16x128xf32> -> vector<16x128xf32>
    %c0_4 = arith.constant 0 : index
    %c0_5 = arith.constant 0 : index
    %6 = vector.load %arg4[%c0_4, %c0_5] : memref<1x128xf32, #tpu.memory_space<vmem>>, vector<1x128xf32>
    %7 = vector.broadcast %6 : vector<1x128xf32> to vector<16x128xf32>
    %8 = arith.addf %5, %7 : vector<16x128xf32>
    %c0_6 = arith.constant 0 : index
    %c0_7 = arith.constant 0 : index
    %9 = vector.load %arg7[%c0_6, %c0_7] : memref<16x1xf32, #tpu.memory_space<vmem>>, vector<16x1xf32>
    %cst_8 = arith.constant dense<0xFF800000> : vector<16xf32>
    %10 = vector.multi_reduction <maximumf>, %8, %cst_8 [1] : vector<16x128xf32> to vector<16xf32>
    %11 = vector.shape_cast %10 : vector<16xf32> to vector<16x1xf32>
    %12 = arith.maximumf %9, %11 : vector<16x1xf32>
    %13 = arith.subf %9, %12 : vector<16x1xf32>
    %14 = math.exp %13 : vector<16x1xf32>
    %c0_9 = arith.constant 0 : index
    %c0_10 = arith.constant 0 : index
    %15 = vector.load %arg8[%c0_9, %c0_10] : memref<16x1xf32, #tpu.memory_space<vmem>>, vector<16x1xf32>
    %16 = arith.mulf %14, %15 : vector<16x1xf32>
    %17 = vector.broadcast %12 : vector<16x1xf32> to vector<16x128xf32>
    %18 = arith.subf %8, %17 : vector<16x128xf32>
    %19 = math.exp %18 : vector<16x128xf32>
    %cst_11 = arith.constant dense<0.000000e+00> : vector<16xf32>
    %20 = vector.multi_reduction <add>, %19, %cst_11 [1] : vector<16x128xf32> to vector<16xf32>
    %21 = vector.shape_cast %20 : vector<16xf32> to vector<16x1xf32>
    %22 = arith.addf %16, %21 : vector<16x1xf32>
    %c0_12 = arith.constant 0 : index
    %c0_13 = arith.constant 0 : index
    %23 = vector.load %arg8[%c0_12, %c0_13] : memref<16x1xf32, #tpu.memory_space<vmem>>, vector<16x1xf32>
    tpu.vector_store %arg8[%c0_12, %c0_13], %22 {strides = array<i32>} : memref<16x1xf32, #tpu.memory_space<vmem>>, vector<16x1xf32>,
    %c0_14 = arith.constant 0 : index
    %c0_15 = arith.constant 0 : index
    %24 = vector.load %arg7[%c0_14, %c0_15] : memref<16x1xf32, #tpu.memory_space<vmem>>, vector<16x1xf32>
    tpu.vector_store %arg7[%c0_14, %c0_15], %12 {strides = array<i32>} : memref<16x1xf32, #tpu.memory_space<vmem>>, vector<16x1xf32>,
    %c0_16 = arith.constant 0 : index
    %c0_17 = arith.constant 0 : index
    %25 = vector.load %arg5[%c0_16, %c0_17] : memref<16x1xi32, #tpu.memory_space<vmem>>, vector<16x1xi32>
    %c128_i32 = arith.constant 128 : i32
    %26 = arith.muli %arg1, %c128_i32 : i32
    %27 = tpu.iota {dimensions = array<i32: 1>} : vector<16x128xi32>
    %28 = vector.broadcast %26 : i32 to vector<16x128xi32>
    %29 = arith.addi %28, %27 : vector<16x128xi32>
    %30 = vector.broadcast %25 : vector<16x1xi32> to vector<16x128xi32>
    %31 = arith.cmpi eq, %29, %30 : vector<16x128xi32>
    %32 = arith.extui %31 : vector<16x128xi1> to vector<16x128xi32>
    %33 = arith.sitofp %32 : vector<16x128xi32> to vector<16x128xf32>
    %c0_18 = arith.constant 0 : index
    %c0_19 = arith.constant 0 : index
    %34 = vector.load %arg9[%c0_18, %c0_19] : memref<16x1xf32, #tpu.memory_space<vmem>>, vector<16x1xf32>
    %35 = arith.mulf %8, %33 : vector<16x128xf32>
    %cst_20 = arith.constant dense<0.000000e+00> : vector<16xf32>
    %36 = vector.multi_reduction <add>, %35, %cst_20 [1] : vector<16x128xf32> to vector<16xf32>
    %37 = vector.shape_cast %36 : vector<16xf32> to vector<16x1xf32>
    %38 = arith.addf %34, %37 : vector<16x1xf32>
    %c0_21 = arith.constant 0 : index
    %c0_22 = arith.constant 0 : index
    %39 = vector.load %arg9[%c0_21, %c0_22] : memref<16x1xf32, #tpu.memory_space<vmem>>, vector<16x1xf32>
    tpu.vector_store %arg9[%c0_21, %c0_22], %38 {strides = array<i32>} : memref<16x1xf32, #tpu.memory_space<vmem>>, vector<16x1xf32>,
    %c1_i32 = arith.constant 1 : i32
    %40 = arith.cmpi eq, %arg1, %c1_i32 : i32
    %41 = arith.extui %40 : i1 to i32
    %c0_i32_23 = arith.constant 0 : i32
    %42 = arith.cmpi ne, %41, %c0_i32_23 : i32
    scf.if %42 {
      %c0_24 = arith.constant 0 : index
      %c0_25 = arith.constant 0 : index
      %43 = vector.load %arg8[%c0_24, %c0_25] : memref<16x1xf32, #tpu.memory_space<vmem>>, vector<16x1xf32>
      %44 = math.log %43 : vector<16x1xf32>
      %c0_26 = arith.constant 0 : index
      %c0_27 = arith.constant 0 : index
      %45 = vector.load %arg7[%c0_26, %c0_27] : memref<16x1xf32, #tpu.memory_space<vmem>>, vector<16x1xf32>
      %46 = arith.addf %44, %45 : vector<16x1xf32>
      %c-100_i32 = arith.constant -100 : i32
      %47 = vector.broadcast %c-100_i32 : i32 to vector<16x1xi32>
      %48 = arith.cmpi ne, %25, %47 : vector<16x1xi32>
      %49 = arith.extui %48 : vector<16x1xi1> to vector<16x1xi32>
      %50 = arith.sitofp %49 : vector<16x1xi32> to vector<16x1xf32>
      %c0_28 = arith.constant 0 : index
      %c0_29 = arith.constant 0 : index
      %51 = vector.load %arg9[%c0_28, %c0_29] : memref<16x1xf32, #tpu.memory_space<vmem>>, vector<16x1xf32>
      %52 = arith.subf %46, %51 : vector<16x1xf32>
      %53 = arith.mulf %52, %50 : vector<16x1xf32>
      %54 = vector.shape_cast %53 : vector<16x1xf32> to vector<1x16x1xf32>
      %cst_30 = arith.constant dense<0.000000e+00> : vector<1xf32>
      %55 = vector.multi_reduction <add>, %54, %cst_30 [1, 2] : vector<1x16x1xf32> to vector<1xf32>
      %56 = vector.shape_cast %55 : vector<1xf32> to vector<1x1x1xf32>
      %57 = vector.extract %56[0, 0, 0] : f32 from vector<1x1x1xf32>
      %c0_31 = arith.constant 0 : index
      %c0_32 = arith.constant 0 : index
      %58 = memref.load %arg6[%c0_31, %c0_32] : memref<1x1xf32, #tpu.memory_space<smem>>
      memref.store %57, %arg6[%c0_31, %c0_32] : memref<1x1xf32, #tpu.memory_space<smem>>
    } else {
    }
    return
  }
  func.func @transform_0(%arg0: i32, %arg1: i32) -> (i32, i32) {
    %c0_i32 = arith.constant 0 : i32
    %c0_i32_0 = arith.constant 0 : i32
    return %arg0, %c0_i32 : i32, i32
  }
  func.func @transform_1(%arg0: i32, %arg1: i32) -> (i32, i32) {
    %c0_i32 = arith.constant 0 : i32
    %c0_i32_0 = arith.constant 0 : i32
    return %c0_i32, %arg1 : i32, i32
  }
  func.func @transform_2(%arg0: i32, %arg1: i32) -> (i32, i32) {
    %c0_i32 = arith.constant 0 : i32
    %c0_i32_0 = arith.constant 0 : i32
    return %c0_i32, %arg1 : i32, i32
  }
  func.func @transform_3(%arg0: i32, %arg1: i32) -> (i32, i32) {
    %c0_i32 = arith.constant 0 : i32
    %c0_i32_0 = arith.constant 0 : i32
    return %arg0, %c0_i32 : i32, i32
  }
  func.func @transform_4(%arg0: i32, %arg1: i32) -> (i32, i32) {
    %c0_i32 = arith.constant 0 : i32
    %c0_i32_0 = arith.constant 0 : i32
    return %arg0, %c0_i32 : i32, i32
  }
}

</mosaic_0001>

<llo_original>
// kernel: tpu_custom_call.1
$region0: #{tpu_custom_call.1}
  #allocation0 [shape = 'u32[]', space=smem, size = 0x4, offset = 0x4, fixed_abs, tag = 'smem constant byte address 0x4 - core index']
  #allocation1 [shape = 'u32[144,128]{1,0:T(1,128)}', space=vmem, size = 0x12000, scoped, tag = 'internal scratch']
  #allocation2 [shape = 'f32[16,1]{1,0:T(8,128)}', space=vmem, size = 0x2000, scoped, tag = 'scratch operand']
  #allocation3 [shape = 'f32[16,1]{1,0:T(8,128)}', space=vmem, size = 0x2000, scoped, tag = 'scratch operand']
  #allocation4 [shape = 'f32[16,1]{1,0:T(8,128)}', space=vmem, size = 0x2000, scoped, tag = 'scratch operand']
  %s0 = inlined_call_operand.vmem [shape: bf16[16,32], index: 0, kind: input, shape index: {}]
  %s1 = inlined_call_operand.hbm [shape: bf16[32,256], index: 1, kind: input, shape index: {}]
  %s2 = inlined_call_operand.vmem [shape: f32[1,256], index: 2, kind: input, shape index: {}]
  %s3 = inlined_call_operand.vmem [shape: s32[16,1], index: 3, kind: input, shape index: {}]
  %s4 = inlined_call_operand.hbm [shape: f32[1,1], index: 4, kind: output, shape index: {}]
  %s5 = sld [smem:[#allocation0]]
  $region61: #{tpu_custom_call.1} parent=0
    _
  %s7 = ssub.s32 1, %s5
  %s8 = scalar_select 0, %s7, %s5
  $region1: #{tpu_custom_call.1} parent=0
    #allocation5 [shape = 'u8[16384]{0}', space=vmem, size = 0x4000, scoped, tag = 'input window, operand 1']
    #allocation6 [shape = 's32[2]{0}', space=sflag, size = 0x8, scoped, tag = 'scoped memory for tpu_custom_call.1']
    #allocation7 [shape = 's32[2]{0}', space=sflag, size = 0x8, scoped, tag = 'scoped memory for tpu_custom_call.1']
    #allocation8 [shape = 'u8[512]{0}', space=smem, size = 0x200, scoped, tag = 'output window, operand 0, single buffered']
    %9 = vsyncpa [#allocation6], 0
    %s10 = scalar_lea.sflag [#allocation6], 1
    %11 = vsyncpa %s10, 0
    %12 = vsyncpa [#allocation7], 0
    loop: start=0, step=1, limit=4
    $region2: #{tpu_custom_call.1} parent=1 // loop_pre_header
      _
    $region3: #{tpu_custom_call.1} parent=1 // loop_header
      %s14 = sphi 0, %s18
      %p15 = scmp.ge.s32.totalorder %s14, 4
      %s21 = sphi 0, %s33
      %s22 = sphi 0, %s29
      %s23 = sphi 0, %s21
      %s24 = sphi 0, %s22
      %s25 = sphi 0, %s23
      %s26 = sphi 0, %s24
      %s36 = sphi 0, %s38
      %s39 = sphi 0, %s36
      %s40 = sphi 0, %s39
      %s56 = sphi 0, %s40
      %s62 = sphi 0, %s64
      %s65 = sphi 0, %s62
      %s66 = sphi 0, %s65
      %s82 = sphi 0, %s66
      %s88 = sphi 0, %s90
      %s91 = sphi 0, %s88
      %s92 = sphi 0, %s91
      %s108 = sphi 0, %s92
      %s114 = sphi 0, %s116
      %s117 = sphi 0, %s114
      %s118 = sphi 0, %s117
      %s134 = sphi 0, %s118
      %s140 = sphi 0, %s142
      %s143 = sphi 0, %s140
      %s144 = sphi 0, %s143
      %s160 = sphi 0, %s144
    $region4: #{tpu_custom_call.1} parent=1 // loop_header_branch
      %17 = sbr.rel (%p15) target = $region8
    $region5: #{tpu_custom_call.1} parent=1 // loop_body
      %s19 = ssub.s32 %s14, 1
      %s20 = ssub.s32 %s14, 2
      %s27 = sadd.s32 1, %s22
      %p28 = scmp.ge.s32.totalorder %s27, 2
      %s29 = scalar_select %p28, 0, %s27
      %s30 = sadd.s32 1, %s21
      %s31 = scalar_select %p28, %s30, %s21
      %p32 = scmp.ge.s32.totalorder %s31, 1
      %s33 = scalar_select %p32, 0, %s31
      %s34 = ssub.s32 %s21, %s33
      %p35 = scmp.eq.s32.totalorder %s34, 0
      %s37 = sadd.s32 %s36, 1
      %s38 = scalar_select %p35, %s36, %s37
      %p41 = pneg %p35
      %p42 = scmp.eq.s32.totalorder %s14, 1
      %p43 = por %p41, %p42
      %p44 = scmp.ne.s32.totalorder %s36, %s39
      %p45 = scmp.eq.s32.totalorder %s14, 0
      %p46 = por %p44, %p45
      %p47 = scmp.ne.s32.totalorder %s36, %s39
      %p48 = scmp.eq.s32.totalorder %s19, 1
      %p49 = por %p47, %p48
      %p50 = scmp.ne.s32.totalorder %s39, %s40
      %p51 = scmp.eq.s32.totalorder %s19, 0
      %p52 = por %p50, %p51
      %p53 = scmp.ne.s32.totalorder %s39, %s40
      %p54 = scmp.eq.s32.totalorder %s20, 1
      %p55 = por %p53, %p54
      %p57 = scmp.ne.s32.totalorder %s40, %s56
      %p58 = scmp.eq.s32.totalorder %s20, 0
      %p59 = por %p57, %p58
      %s60 = ssub.s32 %s22, %s29
      %p61 = scmp.eq.s32.totalorder %s60, 0
      %s63 = sadd.s32 %s62, 1
      %s64 = scalar_select %p61, %s62, %s63
      %p67 = pneg %p61
      %p68 = scmp.eq.s32.totalorder %s14, 1
      %p69 = por %p67, %p68
      %p70 = scmp.ne.s32.totalorder %s62, %s65
      %p71 = scmp.eq.s32.totalorder %s14, 0
      %p72 = por %p70, %p71
      %p73 = scmp.ne.s32.totalorder %s62, %s65
      %p74 = scmp.eq.s32.totalorder %s19, 1
      %p75 = por %p73, %p74
      %p76 = scmp.ne.s32.totalorder %s65, %s66
      %p77 = scmp.eq.s32.totalorder %s19, 0
      %p78 = por %p76, %p77
      %p79 = scmp.ne.s32.totalorder %s65, %s66
      %p80 = scmp.eq.s32.totalorder %s20, 1
      %p81 = por %p79, %p80
      %p83 = scmp.ne.s32.totalorder %s66, %s82
      %p84 = scmp.eq.s32.totalorder %s20, 0
      %p85 = por %p83, %p84
      %s86 = ssub.s32 %s22, %s29
      %p87 = scmp.eq.s32.totalorder %s86, 0
      %s89 = sadd.s32 %s88, 1
      %s90 = scalar_select %p87, %s88, %s89
      %p93 = pneg %p87
      %p94 = scmp.eq.s32.totalorder %s14, 1
      %p95 = por %p93, %p94
      %p96 = scmp.ne.s32.totalorder %s88, %s91
      %p97 = scmp.eq.s32.totalorder %s14, 0
      %p98 = por %p96, %p97
      %p99 = scmp.ne.s32.totalorder %s88, %s91
      %p100 = scmp.eq.s32.totalorder %s19, 1
      %p101 = por %p99, %p100
      %p102 = scmp.ne.s32.totalorder %s91, %s92
      %p103 = scmp.eq.s32.totalorder %s19, 0
      %p104 = por %p102, %p103
      %p105 = scmp.ne.s32.totalorder %s91, %s92
      %p106 = scmp.eq.s32.totalorder %s20, 1
      %p107 = por %p105, %p106
      %p109 = scmp.ne.s32.totalorder %s92, %s108
      %p110 = scmp.eq.s32.totalorder %s20, 0
      %p111 = por %p109, %p110
      %s112 = ssub.s32 %s21, %s33
      %p113 = scmp.eq.s32.totalorder %s112, 0
      %s115 = sadd.s32 %s114, 1
      %s116 = scalar_select %p113, %s114, %s115
      %p119 = pneg %p113
      %p120 = scmp.eq.s32.totalorder %s14, 1
      %p121 = por %p119, %p120
      %p122 = scmp.ne.s32.totalorder %s114, %s117
      %p123 = scmp.eq.s32.totalorder %s14, 0
      %p124 = por %p122, %p123
      %p125 = scmp.ne.s32.totalorder %s114, %s117
      %p126 = scmp.eq.s32.totalorder %s19, 1
      %p127 = por %p125, %p126
      %p128 = scmp.ne.s32.totalorder %s117, %s118
      %p129 = scmp.eq.s32.totalorder %s19, 0
      %p130 = por %p128, %p129
      %p131 = scmp.ne.s32.totalorder %s117, %s118
      %p132 = scmp.eq.s32.totalorder %s20, 1
      %p133 = por %p131, %p132
      %p135 = scmp.ne.s32.totalorder %s118, %s134
      %p136 = scmp.eq.s32.totalorder %s20, 0
      %p137 = por %p135, %p136
      %s138 = ssub.s32 %s21, %s33
      %p139 = scmp.eq.s32.totalorder %s138, 0
      %s141 = sadd.s32 %s140, 1
      %s142 = scalar_select %p139, %s140, %s141
      %p145 = pneg %p139
      %p146 = scmp.eq.s32.totalorder %s14, 1
      %p147 = por %p145, %p146
      %p148 = scmp.ne.s32.totalorder %s140, %s143
      %p149 = scmp.eq.s32.totalorder %s14, 0
      %p150 = por %p148, %p149
      %p151 = scmp.ne.s32.totalorder %s140, %s143
      %p152 = scmp.eq.s32.totalorder %s19, 1
      %p153 = por %p151, %p152
      %p154 = scmp.ne.s32.totalorder %s143, %s144
      %p155 = scmp.eq.s32.totalorder %s19, 0
      %p156 = por %p154, %p155
      %p157 = scmp.ne.s32.totalorder %s143, %s144
      %p158 = scmp.eq.s32.totalorder %s20, 1
      %p159 = por %p157, %p158
      %p161 = scmp.ne.s32.totalorder %s144, %s160
      %p162 = scmp.eq.s32.totalorder %s20, 0
      %p163 = por %p161, %p162
      %p164 = scmp.le.s32.totalorder 1, %s14
      %p165 = scmp.lt.s32.totalorder %s14, 3
      %p166 = pnand %p164, %p165
      %p167 = pneg %p166
      // Predicated region
      $region9: #{tpu_custom_call.1} parent=5 // pred_check
        _
      $region10: #{tpu_custom_call.1} parent=5 // pred_check_branch
        %169 = sbr.rel (%p166) target = $region12
      $region11: #{tpu_custom_call.1} parent=5 // pred_region
        %s170 = ssub.s32 %s14, 1
        // Predicated region
        $region13: #{tpu_custom_call.1} parent=11 // pred_check
          %p171 = pneg %p52
        $region14: #{tpu_custom_call.1} parent=11 // pred_check_branch
          %173 = sbr.rel (%p171) target = $region16
        $region15: #{tpu_custom_call.1} parent=11 // pred_region
          %s174 = smul.u32 2, %s23
          %p175 = scmp.lt.s32.totalorder %s174, 1
          %s176 = scalar_select %p175, %s174, 1
          %s177 = smul.addr %s176, 4
          %s178 = scalar_lea.vmem %s0, %s177
          %s179 = smul.u32 2, %s23
        $region16: #{tpu_custom_call.1} parent=11 // pred_fallthru
          _
        // Predicated region
        $region17: #{tpu_custom_call.1} parent=11 // pred_check
          %p180 = pneg %p130
        $region18: #{tpu_custom_call.1} parent=11 // pred_check_branch
          %182 = sbr.rel (%p180) target = $region20
        $region19: #{tpu_custom_call.1} parent=11 // pred_region
          %s183 = smul.u32 2, %s23
          %p184 = scmp.lt.s32.totalorder %s183, 1
          %s185 = scalar_select %p184, %s183, 1
          %s186 = smul.addr %s185, 8
          %s187 = scalar_lea.vmem %s3, %s186
          %s188 = smul.u32 2, %s23
        $region20: #{tpu_custom_call.1} parent=11 // pred_fallthru
          _
      $region12: #{tpu_custom_call.1} parent=5 // pred_fallthru
        _
      %p189 = scmp.lt.s32.totalorder %s14, 2
      // Predicated region
      $region21: #{tpu_custom_call.1} parent=5 // pred_check
        %p190 = pneg %p189
      $region22: #{tpu_custom_call.1} parent=5 // pred_check_branch
        %192 = sbr.rel (%p190) target = $region24
      $region23: #{tpu_custom_call.1} parent=5 // pred_region
        // Predicated region
        $region25: #{tpu_custom_call.1} parent=23 // pred_check
          %p193 = pneg %p72
        $region26: #{tpu_custom_call.1} parent=23 // pred_check_branch
          %195 = sbr.rel (%p193) target = $region28
        $region27: #{tpu_custom_call.1} parent=23 // pred_region
          %s196 = sand.u32 %s62, 1
          %s197 = scalar_lea.sflag [#allocation6], %s196
          %s198 = sand.u32 %s62, 1
          %s199 = smul.addr %s198, 16
          %s200 = scalar_lea.vmem [#allocation5], %s199
          %s202 = ssub.s32 256, 256
          %203 = vsyncadd %s197, %s202
          %s204 = smul.addr %s22, 64
          %s205 = scalar_lea.hbm %s1, %s204
          %s206 = sshll.u32 %s200, 4
          %s207 = int_to_ptr.vmem [resolvable:$true] %s206
          %212 = dma.hbm_to_vmem [thread:$0]  %s205, 256, %s207, %s197, 128, 64, 4
        $region28: #{tpu_custom_call.1} parent=23 // pred_fallthru
          _
        // Predicated region
        $region29: #{tpu_custom_call.1} parent=23 // pred_check
          %p213 = pneg %p98
        $region30: #{tpu_custom_call.1} parent=23 // pred_check_branch
          %215 = sbr.rel (%p213) target = $region32
        $region31: #{tpu_custom_call.1} parent=23 // pred_region
          %p216 = scmp.lt.s32.totalorder %s22, 1
          %s217 = scalar_select %p216, %s22, 1
          %s218 = scalar_lea.vmem %s2, %s217
        $region32: #{tpu_custom_call.1} parent=23 // pred_fallthru
          _
      $region24: #{tpu_custom_call.1} parent=5 // pred_fallthru
        _
      %p219 = scmp.le.s32.totalorder 1, %s14
      %p220 = scmp.lt.s32.totalorder %s14, 3
      %p221 = pnand %p219, %p220
      %p222 = pneg %p221
      // Predicated region
      $region33: #{tpu_custom_call.1} parent=5 // pred_check
        _
      $region34: #{tpu_custom_call.1} parent=5 // pred_check_branch
        %224 = sbr.rel (%p221) target = $region36
      $region35: #{tpu_custom_call.1} parent=5 // pred_region
        %s225 = ssub.s32 %s14, 1
        %s226 = sand.u32 %s65, 1
        %s227 = scalar_lea.sflag [#allocation6], %s226
        %s228 = sand.u32 %s65, 1
        %s229 = smul.addr %s228, 16
        %s230 = scalar_lea.vmem [#allocation5], %s229
        // Predicated region
        $region37: #{tpu_custom_call.1} parent=35 // pred_check
          %p231 = pneg %p78
        $region38: #{tpu_custom_call.1} parent=35 // pred_check_branch
          %233 = sbr.rel (%p231) target = $region40
        $region39: #{tpu_custom_call.1} parent=35 // pred_region
          %234 = dma.done %s227, 256
        $region40: #{tpu_custom_call.1} parent=35 // pred_fallthru
          _
        %s235 = smul.u32 2, %s23
        %p236 = scmp.lt.s32.totalorder %s235, 1
        %s237 = scalar_select %p236, %s235, 1
        %s238 = smul.addr %s237, 4
        %s239 = scalar_lea.vmem %s0, %s238
        %p240 = pneg %p52
        %p241 = pneg %p49
        %s242 = sand.u32 %s65, 1
        %s243 = scalar_lea.sflag [#allocation6], %s242
        %s244 = sand.u32 %s65, 1
        %s245 = smul.addr %s244, 16
        %s246 = scalar_lea.vmem [#allocation5], %s245
        %p247 = pneg %p78
        %p248 = pneg %p75
        %p249 = scmp.lt.s32.totalorder %s24, 1
        %s250 = scalar_select %p249, %s24, 1
        %s251 = scalar_lea.vmem %s2, %s250
        %p252 = pneg %p104
        %p253 = pneg %p101
        %s254 = smul.u32 2, %s23
        %p255 = scmp.lt.s32.totalorder %s254, 1
        %s256 = scalar_select %p255, %s254, 1
        %s257 = smul.addr %s256, 8
        %s258 = scalar_lea.vmem %s3, %s257
        %p259 = pneg %p130
        %p260 = pneg %p127
        %p261 = pneg %p156
        %p262 = pneg %p153
        %s263 = smul.u32 2, %s23
        %p264 = scmp.lt.s32.totalorder %s263, 1
        %s265 = scalar_select %p264, %s263, 1
        %s266 = smul.addr %s265, 4
        %s267 = scalar_lea.vmem %s0, %s266
        %s268 = smul.u32 2, %s23
        %p269 = scmp.lt.s32.totalorder %s24, 1
        %s270 = scalar_select %p269, %s24, 1
        %s271 = scalar_lea.vmem %s2, %s270
        %s272 = smul.u32 2, %s23
        %p273 = scmp.lt.s32.totalorder %s272, 1
        %s274 = scalar_select %p273, %s272, 1
        %s275 = smul.addr %s274, 8
        %s276 = scalar_lea.vmem %s3, %s275
        %s277 = smul.u32 2, %s23
        %p279 = scmp.eq.s32.totalorder %s24, 0
        // Predicated region
        $region41: #{tpu_custom_call.1} parent=35 // pred_check
          %p280 = pneg %p279
        $region42: #{tpu_custom_call.1} parent=35 // pred_check_branch
          %282 = sbr.rel (%p280) target = $region44
        $region43: #{tpu_custom_call.1} parent=35 // pred_region
          %vm283 = vcmask 7168
          %284 = vst.msk [vmem:[#allocation2] sm:$0xff] %vm283, -inf
          %285 = vst.msk [vmem:[#allocation2 + $0x8] sm:$0xff] %vm283, -inf
          %286 = vst.msk [vmem:[#allocation3] sm:$0xff] %vm283, 0.0
          %287 = vst.msk [vmem:[#allocation3 + $0x8] sm:$0xff] %vm283, 0.0
          %288 = vst.msk [vmem:[#allocation4] sm:$0xff] %vm283, 0.0
          %289 = vst.msk [vmem:[#allocation4 + $0x8] sm:$0xff] %vm283, 0.0
        $region44: #{tpu_custom_call.1} parent=35 // pred_fallthru
          _
        %v290 = vld [vmem:[%s267] sm:$0xf]
        %v291 = vld [vmem:[%s267 + $0x4] sm:$0xf]
        %v292 = vld [vmem:[%s230] sm:$0xf]
        %v293 = vld [vmem:[%s230 + $0x4] sm:$0xf]
        %v294 = vld [vmem:[%s230 + $0x8] sm:$0xf]
        %v295 = vld [vmem:[%s230 + $0xc] sm:$0xf]
        %v296 = vld [vmem:[%s271] sm:$0x1]
        %v298 = vlaneseq
        %v299 = vshrl.u32 %v298, 7
        %v300 = vsub.s32 0, %v299
        %v301 = vrot.slane %v296, %v300
        %v305 = vunpack.c.l.b16 %v290
        %v306 = vunpack.c.l.b16 %v291
        %v307 = vpack.c.b16 %v306, %v305
        %v312 = vunpack.c.l.b16 %v292
        %v313 = vunpack.c.l.b16 %v293
        %v314 = vunpack.c.l.b16 %v294
        %v315 = vunpack.c.l.b16 %v295
        %v316 = vpack.c.b16 %v313, %v312
        %v317 = vpack.c.b16 %v315, %v314
        %vm320 = vcmask 261120
        %v322 = vsel %vm320, %v307, 0
        %324 = vmatprep.subr.bf16.mxu0 0
        %325 = vmatpush1.bf16.msra.mxu0 0
        %326 = vmatprep.subr.bf16.mxu0 0
        %327 = vmatpush1.bf16.msra.mxu0 0
        %328 = vmatprep.subr.bf16.mxu0 0
        %329 = vmatpush1.bf16.msra.mxu0 0
        %330 = vmatprep.subr.bf16.mxu0 0
        %331 = vmatpush1.bf16.msra.mxu0 0
        %332 = vmatprep.subr.bf16.mxu0 0
        %333 = vmatpush1.bf16.msra.mxu0 0
        %334 = vmatprep.subr.bf16.mxu0 0
        %335 = vmatpush1.bf16.msra.mxu0 0
        %336 = vmatprep.subr.bf16.mxu0 0
        %337 = vmatpush1.bf16.msra.mxu0 %v317
        %338 = vmatprep.subr.bf16.mxu0 0
        %339 = vmatpush1.bf16.msra.mxu0 %v316
        %340 = vmatprep.subr.bf16.mxu0 0
        %341 = vmatpush2.bf16.msra.mxu0 0
        %342 = vmatprep.subr.bf16.mxu0 0
        %343 = vmatpush2.bf16.msra.mxu0 0
        %344 = vmatprep.subr.bf16.mxu0 0
        %345 = vmatpush2.bf16.msra.mxu0 0
        %346 = vmatprep.subr.bf16.mxu0 0
        %347 = vmatpush2.bf16.msra.mxu0 0
        %348 = vmatprep.subr.bf16.mxu0 0
        %349 = vmatpush2.bf16.msra.mxu0 0
        %350 = vmatprep.subr.bf16.mxu0 0
        %351 = vmatpush2.bf16.msra.mxu0 0
        %352 = vmatprep.subr.bf16.mxu0 0
        %353 = vmatpush2.bf16.msra.mxu0 0
        %354 = vmatprep.subr.bf16.mxu0 0
        %355 = vmatpush2.bf16.msra.mxu0 0
        %356 = vmatprep.mubr.bf16.mxu0 0
        %357 = vmatmul.mubr.bf16.gmra.mxu0 %v322
        %v358 = vpop.f32.mrf.mxu0
        %v359 = vadd.f32 %v301, %v358
        %v360 = vpop.f32.mrf.mxu0
        %v361 = vpop.f32.mrf.mxu0
        %v362 = vadd.f32 %v301, %v361
        %v363 = vpop.f32.mrf.mxu0
        %364 = vdwg.mxu0
        %v365 = vld [vmem:[#allocation2] sm:$0xff]
        %v366 = vld [vmem:[#allocation2 + $0x8] sm:$0xff]
        %367 = vmax.xlane.f32.xlu0 %v359
        %v368 = vpop.xlane.xlu0 %367
        %369 = vmax.xlane.f32.xlu0 %v362
        %v370 = vpop.xlane.xlu0 %369
        %v371 = vmax.f32 %v365, %v368
        %v372 = vmax.f32 %v366, %v370
        %v373 = vsub.f32 %v365, %v371
        %v374 = vsub.f32 %v366, %v372
        %v375 = vmul.f32 %v373, 1.442695
        %v376 = vpow.pop %v375
        %v377 = vmul.f32 %v374, 1.442695
        %v378 = vpow.pop %v377
        %v379 = vld [vmem:[#allocation3] sm:$0xff]
        %v380 = vld [vmem:[#allocation3 + $0x8] sm:$0xff]
        %v381 = vmul.f32 %v376, %v379
        %v382 = vmul.f32 %v378, %v380
        %384 = vset.pattern.permute.xlu0 0
        %385 = vperm.xlu0 %384, %v371
        %v386 = vpop.permute.xlu0 %385
        %389 = vset.pattern.permute.xlu0 0
        %390 = vperm.xlu0 %389, %v372
        %v391 = vpop.permute.xlu0 %390
        %v393 = vsub.f32 %v359, %v386
        %v394 = vsub.f32 %v362, %v391
        %v395 = vmul.f32 %v393, 1.442695
        %v396 = vpow.pop %v395
        %v397 = vmul.f32 %v394, 1.442695
        %v398 = vpow.pop %v397
        %399 = vadd.xlane.f32.xlu0 %v396
        %v400 = vpop.xlane.xlu0 %399
        %401 = vadd.xlane.f32.xlu0 %v398
        %v402 = vpop.xlane.xlu0 %401
        %v403 = vadd.f32 %v381, %v400
        %v404 = vadd.f32 %v382, %v402
        %vm405 = vcmask 7168
        %406 = vst.msk [vmem:[#allocation3] sm:$0xff] %vm405, %v403
        %407 = vst.msk [vmem:[#allocation3 + $0x8] sm:$0xff] %vm405, %v404
        %408 = vst.msk [vmem:[#allocation2] sm:$0xff] %vm405, %v371
        %409 = vst.msk [vmem:[#allocation2 + $0x8] sm:$0xff] %vm405, %v372
        %v410 = vld [vmem:[%s276] sm:$0xff]
        %v411 = vld [vmem:[%s276 + $0x8] sm:$0xff]
        %s412 = smul.u32 %s24, 128
        %v413 = vlaneseq
        %v414 = vand.u32 %v413, 127
        %v415 = vstv %s412
        %v416 = vadd.s32 %v415, %v414
        %417 = vset.pattern.permute.xlu0 0
        %418 = vperm.xlu0 %417, %v410
        %v419 = vpop.permute.xlu0 %418
        %420 = vset.pattern.permute.xlu0 0
        %421 = vperm.xlu0 %420, %v411
        %v422 = vpop.permute.xlu0 %421
        %vm423 = vcmp.eq.s32.totalorder %v416, %v419
        %vm424 = vcmp.eq.s32.totalorder %v416, %v422
        %v425 = vsel %vm423, 1, 0
        %v426 = vsel %vm424, 1, 0
        %v427 = vcvt.s32.f32 %v425
        %v428 = vcvt.s32.f32 %v426
        %v429 = vld [vmem:[#allocation4] sm:$0xff]
        %v430 = vld [vmem:[#allocation4 + $0x8] sm:$0xff]
        %v431 = vmul.f32 %v359, %v427
        %v432 = vmul.f32 %v362, %v428
        %433 = vadd.xlane.f32.xlu0 %v431
        %v434 = vpop.xlane.xlu0 %433
        %435 = vadd.xlane.f32.xlu0 %v432
        %v436 = vpop.xlane.xlu0 %435
        %v437 = vadd.f32 %v429, %v434
        %v438 = vadd.f32 %v430, %v436
        %439 = vst.msk [vmem:[#allocation4] sm:$0xff] %vm405, %v437
        %440 = vst.msk [vmem:[#allocation4 + $0x8] sm:$0xff] %vm405, %v438
        %p441 = scmp.eq.s32.totalorder %s24, 1
        // Predicated region
        $region45: #{tpu_custom_call.1} parent=35 // pred_check
          %p442 = pneg %p441
        $region46: #{tpu_custom_call.1} parent=35 // pred_check_branch
          %444 = sbr.rel (%p442) target = $region48
        $region47: #{tpu_custom_call.1} parent=35 // pred_region
          %v445 = vld [vmem:[#allocation3] sm:$0xff]
          %v446 = vld [vmem:[#allocation3 + $0x8] sm:$0xff]
          %v447 = vlog2.pop %v445
          %v448 = vmul.f32 %v447, 0.6931472
          %v449 = vlog2.pop %v446
          %v450 = vmul.f32 %v449, 0.6931472
          %v451 = vld [vmem:[#allocation2] sm:$0xff]
          %v452 = vld [vmem:[#allocation2 + $0x8] sm:$0xff]
          %v453 = vadd.f32 %v448, %v451
          %v454 = vadd.f32 %v450, %v452
          %vm455 = vcmp.ne.s32.totalorder %v410, 4294967196
          %vm456 = vcmp.ne.s32.totalorder %v411, 4294967196
          %v457 = vsel %vm455, 1, 0
          %v458 = vsel %vm456, 1, 0
          %v459 = vcvt.s32.f32 %v457
          %v460 = vcvt.s32.f32 %v458
          %v461 = vld [vmem:[#allocation4] sm:$0xff]
          %v462 = vld [vmem:[#allocation4 + $0x8] sm:$0xff]
          %v463 = vsub.f32 %v453, %v461
          %v464 = vsub.f32 %v454, %v462
          %v465 = vmul.f32 %v463, %v459
          %v466 = vmul.f32 %v464, %v460
          %v467 = vsel %vm405, %v465, 0.0
          %v468 = vsel %vm405, %v466, 0.0
          %v469 = vadd.f32 %v467, %v468
          %470 = vadd.xlane.f32.xlu0 %v469
          %v471 = vpop.xlane.xlu0 %470
          %v472 = vrot.slane %v471, 4
          %v473 = vadd.f32 %v471, %v472
          %v474 = vrot.slane %v473, 2
          %v475 = vadd.f32 %v473, %v474
          %v476 = vrot.slane %v475, 1
          %v477 = vadd.f32 %v475, %v476
          %s478 = vtos %v477
          %s479 = scalar_lea.smem [#allocation8], 0
          %480 = sst [smem:[%s479]] %s478
        $region48: #{tpu_custom_call.1} parent=35 // pred_fallthru
          _
        // Predicated region
        $region49: #{tpu_custom_call.1} parent=35 // pred_check
          %p481 = pneg %p153
        $region50: #{tpu_custom_call.1} parent=35 // pred_check_branch
          %483 = sbr.rel (%p481) target = $region52
        $region51: #{tpu_custom_call.1} parent=35 // pred_region
          %s485 = ssub.s32 16, 16
          %486 = vsyncadd [#allocation7], %s485
          %s487 = smul.addr %s23, 16
          %s488 = scalar_lea.hbm %s4, %s487
          %491 = dma.smem_to_hbm [#allocation8], 16, %s488, [#allocation7]
        $region52: #{tpu_custom_call.1} parent=35 // pred_fallthru
          _
        // Predicated region
        $region53: #{tpu_custom_call.1} parent=35 // pred_check
          %p492 = pneg %p153
        $region54: #{tpu_custom_call.1} parent=35 // pred_check_branch
          %494 = sbr.rel (%p492) target = $region56
        $region55: #{tpu_custom_call.1} parent=35 // pred_region
          %495 = dma.done [#allocation7], 16
        $region56: #{tpu_custom_call.1} parent=35 // pred_fallthru
          _
        %496 = sfence
      $region36: #{tpu_custom_call.1} parent=5 // pred_fallthru
        _
      %p497 = scmp.le.s32.totalorder 2, %s14
      // Predicated region
      $region57: #{tpu_custom_call.1} parent=5 // pred_check
        %p498 = pneg %p497
      $region58: #{tpu_custom_call.1} parent=5 // pred_check_branch
        %500 = sbr.rel (%p498) target = $region60
      $region59: #{tpu_custom_call.1} parent=5 // pred_region
        %s501 = ssub.s32 %s14, 2
      $region60: #{tpu_custom_call.1} parent=5 // pred_fallthru
        _
    $region6: #{tpu_custom_call.1} parent=1 // loop_footer
      %s18 = sadd.s32 1, %s14
    $region7: #{tpu_custom_call.1} parent=1 // loop_footer_branch
      %13 = sbr.rel target = $region3
    $region8: #{tpu_custom_call.1} parent=1 // loop_exit
      _
    %502 = vsyncpa [#allocation6], 1
    %s503 = scalar_lea.sflag [#allocation6], 1
    %504 = vsyncpa %s503, 1
    %505 = vsyncpa [#allocation7], 1
    %s506 = scalar_lea.sflag [#allocation7], 1
    %507 = vsyncpa %s506, 1

</llo_original>
